<compile_context>
chip_gen: v6e
topology: v6e:2x2x1
jax: 0.10.0
libtpu: 0.0.40
codegen_flags: <defaults>
</compile_context>

<pallas_src>
import functools

import numpy as np

import jax
import jax.numpy as jnp
from jax.experimental import pallas as pl
from jax.experimental.pallas import tpu as pltpu


def _ntxent_kernel(row_ref, par_ref, col_ref, loss_ref, state_ref, *,
                   block_rows, block_cols, batch, padded_batch, exp_dtype):
    """One (tr, tc) tile of the (2*Bp, 2*Bp) similarity matrix.

    row_ref : (tr, D) rows of reps (pre-normalized, pre-scaled, matmul dtype)
    par_ref : (tr, D) partner rows (row i of this block pairs with par row i)
    col_ref : (tc, D) columns of reps
    loss_ref: (tr, 1) per-row loss, written once per row block at the last
              column block.
    state_ref: (tr, 2) f32 scratch, col 0 = running max m, col 1 = running sum l.
    """
    rb = pl.program_id(0)              # row-block axis  ("parallel")
    cb = pl.program_id(1)              # col-block axis  ("arbitrary", last)
    n_cb = pl.num_programs(1)
    tr, tc = block_rows, block_cols

    @pl.when(cb == 0)
    def _init():
        state_ref[:, 0:1] = jnp.full((tr, 1), -jnp.inf, jnp.float32)
        state_ref[:, 1:2] = jnp.zeros((tr, 1), jnp.float32)

    # One wide MXU matmul: sim/T for this (tr, tc) tile.  Operands are already
    # normalized and carry sqrt(1/T) each, so no per-element scaling is needed.
    s = jax.lax.dot_general(row_ref[...], col_ref[...],
                            (((1,), (1,)), ((), ())),
                            preferred_element_type=jnp.float32)

    # Mask the self-similarity diagonal (and zero-padded columns) only on tiles
    # that can actually contain them.
    row0 = rb * tr
    col0 = cb * tc
    need_mask = jnp.logical_and(row0 < col0 + tc, col0 < row0 + tr)  # diag hits tile
    if padded_batch > batch:            # static: padding exists at all?
        col1 = col0 + tc
        pad_lo = jnp.logical_and(col0 < padded_batch, col1 > batch)   # [B, Bp)
        pad_hi = col1 > padded_batch + batch                          # [Bp+B, 2Bp)
        need_mask = need_mask | pad_lo | pad_hi

    def _apply_mask(sv):
        rows = jax.lax.broadcasted_iota(jnp.int32, (tr, tc), 0) + row0
        cols = jax.lax.broadcasted_iota(jnp.int32, (tr, tc), 1) + col0
        kill = rows == cols
        if padded_batch > batch:
            kill = jnp.logical_or(kill, (cols % padded_batch) >= batch)
        return jnp.where(kill, jnp.float32(-1e30), sv)

    s = jax.lax.cond(need_mask, _apply_mask, lambda sv: sv, s)

    # Flash-style online log-sum-exp over the column axis.
    m_prev = state_ref[:, 0:1]
    l_prev = state_ref[:, 1:2]
    m_new = jnp.maximum(m_prev, jnp.max(s, axis=-1, keepdims=True))
    # exp_dtype=bf16 is an optional v6e/v7x knob (2x EUP rate); f32 by default.
    p = jnp.sum(jnp.exp((s - m_new).astype(exp_dtype)).astype(jnp.float32),
                axis=-1, keepdims=True)
    l_new = jnp.exp(m_prev - m_new) * l_prev + p
    state_ref[:, 0:1] = m_new
    state_ref[:, 1:2] = l_new

    @pl.when(cb == n_cb - 1)
    def _finalize():
        # Positive logit: row-wise dot of the row block with its partner block,
        # computed from the same pre-scaled operands the MXU consumed
        # (numerator/denominator consistent).  Already includes the 1/T factor.
        pos = jnp.sum(row_ref[...].astype(jnp.float32) *
                      par_ref[...].astype(jnp.float32),
                      axis=-1, keepdims=True)
        loss_ref[...] = (m_new + jnp.log(l_new)) - pos


def _round_up(x, m):
    return ((x + m - 1) // m) * m


def _pick_tile(n, target):
    """Largest tile t <= target with t | n, preferring MXU/lane-friendly
    alignments (256, then 128, then 8).  n must be a multiple of 8."""
    target = max(8, min(int(target), n))
    for align in (256, 128, 8):
        if target >= align and n % align == 0:
            t = target - (target % align)
            while n % t:
                t -= align
            return t
    return 8


def ntxent_loss(zis, zjs, temperature=0.5, use_cosine_similarity=True, *,
                block_rows=256, block_cols=512,
                matmul_dtype=jnp.bfloat16, exp_dtype=jnp.float32):
    """NT-Xent (SimCLR) loss. zis, zjs: [B, D]. Returns a scalar float32.

    The (2B, 2B) similarity matrix is tiled into (block_rows x block_cols)
    tiles; the defaults (256 x 512) use ~2-3 MiB of VMEM with double buffering,
    comfortably inside the scoped-VMEM defaults of v5e/v6e and v7x's 64 MiB.
    If you push tiles toward 512 x 1024, keep the total footprint under ~40-48
    MiB on v7x and raise vmem_limit_bytes via pltpu.CompilerParams.

    matmul_dtype: MXU operand dtype (bf16 default; accumulation is f32).  Pass
    jnp.float32 for bit-closer parity with the PyTorch f32 forward.
    exp_dtype: set to jnp.bfloat16 on v6e/v7x only if the EUP exp is the
    binding slot; keep f32 on v5e (no bf16 EUP).
    """
    b, d = zis.shape
    assert zjs.shape == (b, d), (zis.shape, zjs.shape)

    bp = _round_up(b, 8)                       # padded half size
    tr = _pick_tile(bp, block_rows)            # row tile (over 2*bp rows)
    tc = _pick_tile(2 * bp, block_cols)        # col tile (over 2*bp cols)
    n_rows = 2 * bp

    # ---- One-time XLA prep pass (hoisted out of the kernel) -----------------
    def _pad(x):
        return jnp.pad(x, ((0, bp - b), (0, 0))) if bp > b else x

    reps = jnp.concatenate([_pad(zjs), _pad(zis)], axis=0).astype(jnp.float32)
    if use_cosine_similarity:
        # torch CosineSimilarity clamps ||x||*||y|| by eps=1e-8; clamping each
        # row's sum-of-squares by eps^2 is equivalent for real inputs.
        ss = jnp.sum(reps * reps, axis=-1, keepdims=True)
        reps = reps * jax.lax.rsqrt(jnp.maximum(ss, jnp.float32(1e-16)))
    # Fold 1/temperature into *both* operands as sqrt(1/T): sim/T comes out of
    # the MXU (and the positive row-dot) with zero in-kernel scaling work.
    inv_t_sqrt = (1.0 / float(temperature)) ** 0.5
    reps = (reps * jnp.float32(inv_t_sqrt)).astype(matmul_dtype)
    # -------------------------------------------------------------------------

    hb = bp // tr                 # row-block offset of the partner half
    nrb = n_rows // tr            # number of row blocks (always >= 2)
    grid = (nrb, n_rows // tc)

    kernel = functools.partial(
        _ntxent_kernel,
        block_rows=tr, block_cols=tc,
        batch=b, padded_batch=bp,
        exp_dtype=exp_dtype)

    per_row = pl.pallas_call(
        kernel,
        out_shape=jax.ShapeDtypeStruct((n_rows, 1), jnp.float32),
        grid_spec=pltpu.PrefetchScalarGridSpec(
            num_scalar_prefetch=0,
            grid=grid,
            in_specs=[
                # Row block: constant along the cb axis -> fetched once per rb.
                pl.BlockSpec((tr, d), lambda rb, cb: (rb, 0)),
                # Partner row block (row i pairs with reps[(i + bp) mod 2bp]).
                pl.BlockSpec((tr, d), lambda rb, cb: ((rb + hb) % nrb, 0)),
                # Column block (reduction axis).
                pl.BlockSpec((tc, d), lambda rb, cb: (cb, 0)),
            ],
            out_specs=pl.BlockSpec((tr, 1), lambda rb, cb: (rb, 0)),
            scratch_shapes=[pltpu.VMEM((tr, 2), jnp.float32)],
        ),
        compiler_params=pltpu.CompilerParams(
            dimension_semantics=("parallel", "arbitrary")),
    )(reps, reps, reps)

    # Tiny O(B) reduction (drop padded rows) + CrossEntropy(sum)/(2B) in XLA.
    valid = jnp.concatenate([per_row[:b, 0], per_row[bp:bp + b, 0]])
    return jnp.sum(valid) / (2.0 * b)


def _ntxent_reference(zis, zjs, temperature, use_cosine):
    """Pure-numpy re-implementation of the PyTorch forward, for verification."""
    zis = np.asarray(zis, np.float64)
    zjs = np.asarray(zjs, np.float64)
    b = zis.shape[0]
    reps = np.concatenate([zjs, zis], axis=0)
    if use_cosine:
        nrm = np.linalg.norm(reps, axis=-1, keepdims=True)
        sim = (reps @ reps.T) / np.maximum(nrm * nrm.T, 1e-8)
    else:
        sim = reps @ reps.T
    n = 2 * b
    l_pos = np.diagonal(sim, b)
    r_pos = np.diagonal(sim, -b)
    positives = np.concatenate([l_pos, r_pos]).reshape(n, 1)
    mask = (1 - (np.eye(n) + np.eye(n, k=-b) + np.eye(n, k=b))).astype(bool)
    negatives = sim[mask].reshape(n, n - 2)
    logits = np.concatenate([positives, negatives], axis=1) / temperature
    mx = logits.max(axis=-1, keepdims=True)
    lse = mx[:, 0] + np.log(np.exp(logits - mx).sum(axis=-1))
    return float(np.sum(lse - logits[:, 0]) / n)


if __name__ == "__main__":
    key = jax.random.PRNGKey(0)
    k1, k2 = jax.random.split(key)
    B, D = 16, 64
    temperature = 0.5

    zis = jax.random.normal(k1, (B, D), dtype=jnp.float32)
    zjs = jax.random.normal(k2, (B, D), dtype=jnp.float32)

    ref = _ntxent_reference(zis, zjs, temperature, True)

    # 1) Default config: bf16 MXU operands, auto tiles (2 row blocks, 1 col block).
    loss = jax.block_until_ready(ntxent_loss(zis, zjs, temperature, True))
    assert jnp.allclose(loss, ref, rtol=5e-2, atol=5e-2), (float(loss), ref)

    # 2) f32 operands + tiny tiles: exercises the online LSE across 4 column
    #    blocks, the partner-block index map and the gated diagonal masking.
    loss_f32 = jax.block_until_ready(
        ntxent_loss(zis, zjs, temperature, True,
                    block_rows=8, block_cols=8, matmul_dtype=jnp.float32))
    assert jnp.allclose(loss_f32, ref, rtol=2e-3, atol=2e-3), (float(loss_f32), ref)

    # 3) Dot-product similarity path.
    ref_d = _ntxent_reference(zis, zjs, temperature, False)
    loss_d = jax.block_until_ready(
        ntxent_loss(zis, zjs, temperature, False,
                    block_rows=8, block_cols=8, matmul_dtype=jnp.float32))
    assert jnp.allclose(loss_d, ref_d, rtol=2e-3, atol=2e-3), (float(loss_d), ref_d)

    # 4) Batch not a multiple of 8: exercises the padded-row / padded-column path.
    Bo = 12
    zis_o, zjs_o = zis[:Bo], zjs[:Bo]
    ref_o = _ntxent_reference(zis_o, zjs_o, temperature, True)
    loss_o = jax.block_until_ready(ntxent_loss(zis_o, zjs_o, temperature, True))
    assert jnp.allclose(loss_o, ref_o, rtol=5e-2, atol=5e-2), (float(loss_o), ref_o)

    print("KERNEL_OK")
</pallas_src>

<mosaic_0001>
module attributes {stable_mosaic.version = 11 : i64} {
  func.func @_ntxent_kernel(%arg0: i32, %arg1: i32, %arg2: memref<16x64xbf16, #tpu.memory_space<vmem>>, %arg3: memref<16x64xbf16, #tpu.memory_space<vmem>>, %arg4: memref<32x64xbf16, #tpu.memory_space<vmem>>, %arg5: memref<16x1xf32, #tpu.memory_space<vmem>>, %arg6: memref<16x2xf32, #tpu.memory_space<vmem>>) attributes {dimension_semantics = [#tpu.dimension_semantics<parallel>, #tpu.dimension_semantics<arbitrary>], iteration_bounds = array<i64: 2, 1>, scalar_prefetch = 0 : i64, scratch_operands = 1 : i64, tpu.core_type = #tpu.core_type<tc>, window_params = [{transform_indices = @transform_0, window_bounds = array<i64: 16, 64>}, {transform_indices = @transform_1, window_bounds = array<i64: 16, 64>}, {transform_indices = @transform_2, window_bounds = array<i64: 32, 64>}, {transform_indices = @transform_3, window_bounds = array<i64: 16, 1>}]} {
    %c0_i32 = arith.constant 0 : i32
    %0 = arith.cmpi eq, %arg1, %c0_i32 : i32
    %1 = arith.extui %0 : i1 to i32
    %c0_i32_0 = arith.constant 0 : i32
    %2 = arith.cmpi ne, %1, %c0_i32_0 : i32
    scf.if %2 {
      %cst_18 = arith.constant 0xFF800000 : f32
      %35 = vector.broadcast %cst_18 : f32 to vector<16x1xf32>
      %c0_19 = arith.constant 0 : index
      %c0_20 = arith.constant 0 : index
      %36 = vector.load %arg6[%c0_19, %c0_20] : memref<16x2xf32, #tpu.memory_space<vmem>>, vector<16x1xf32>
      tpu.vector_store %arg6[%c0_19, %c0_20], %35 {strides = array<i32>} : memref<16x2xf32, #tpu.memory_space<vmem>>, vector<16x1xf32>,
      %cst_21 = arith.constant 0.000000e+00 : f32
      %37 = vector.broadcast %cst_21 : f32 to vector<16x1xf32>
      %c0_22 = arith.constant 0 : index
      %c1_23 = arith.constant 1 : index
      %38 = vector.load %arg6[%c0_22, %c1_23] : memref<16x2xf32, #tpu.memory_space<vmem>>, vector<16x1xf32>
      tpu.vector_store %arg6[%c0_22, %c1_23], %37 {strides = array<i32>} : memref<16x2xf32, #tpu.memory_space<vmem>>, vector<16x1xf32>,
    } else {
    }
    %c0 = arith.constant 0 : index
    %c0_1 = arith.constant 0 : index
    %3 = vector.load %arg2[%c0, %c0_1] : memref<16x64xbf16, #tpu.memory_space<vmem>>, vector<16x64xbf16>
    %c0_2 = arith.constant 0 : index
    %c0_3 = arith.constant 0 : index
    %4 = vector.load %arg4[%c0_2, %c0_3] : memref<32x64xbf16, #tpu.memory_space<vmem>>, vector<32x64xbf16>
    %cst = arith.constant dense<0.000000e+00> : vector<16x32xf32>
    %5 = tpu.matmul %3, %4, %cst {dimension_numbers = #tpu.dot_dimension_numbers<[1], [1], [0], [0], [0, 0, 1, 0], [], []>} : vector<16x64xbf16>, vector<32x64xbf16>, vector<16x32xf32> -> vector<16x32xf32>
    %c16_i32 = arith.constant 16 : i32
    %6 = arith.muli %arg0, %c16_i32 : i32
    %c32_i32 = arith.constant 32 : i32
    %7 = arith.muli %arg1, %c32_i32 : i32
    %c32_i32_4 = arith.constant 32 : i32
    %8 = arith.addi %7, %c32_i32_4 : i32
    %9 = arith.cmpi slt, %6, %8 : i32
    %c16_i32_5 = arith.constant 16 : i32
    %10 = arith.addi %6, %c16_i32_5 : i32
    %11 = arith.cmpi slt, %7, %10 : i32
    %12 = arith.andi %9, %11 : i1
    %13 = arith.extui %12 : i1 to i32
    %c0_i32_6 = arith.constant 0 : i32
    %14 = arith.cmpi ne, %13, %c0_i32_6 : i32
    %15 = scf.if %14 -> (vector<16x32xf32>) {
      %35 = tpu.iota {dimensions = array<i32: 0>} : vector<16x32xi32>
      %36 = vector.broadcast %6 : i32 to vector<16x32xi32>
      %37 = arith.addi %35, %36 : vector<16x32xi32>
      %38 = tpu.iota {dimensions = array<i32: 1>} : vector<16x32xi32>
      %39 = vector.broadcast %7 : i32 to vector<16x32xi32>
      %40 = arith.addi %38, %39 : vector<16x32xi32>
      %41 = arith.cmpi eq, %37, %40 : vector<16x32xi32>
      %cst_18 = arith.constant -1.000000e+30 : f32
      %42 = vector.broadcast %cst_18 : f32 to vector<16x32xf32>
      %43 = arith.select %41, %42, %5 : vector<16x32xi1>, vector<16x32xf32>
      scf.yield %43 : vector<16x32xf32>
    } else {
      scf.yield %5 : vector<16x32xf32>
    }
    %c0_7 = arith.constant 0 : index
    %c0_8 = arith.constant 0 : index
    %16 = vector.load %arg6[%c0_7, %c0_8] : memref<16x2xf32, #tpu.memory_space<vmem>>, vector<16x1xf32>
    %c0_9 = arith.constant 0 : index
    %c1 = arith.constant 1 : index
    %17 = vector.load %arg6[%c0_9, %c1] : memref<16x2xf32, #tpu.memory_space<vmem>>, vector<16x1xf32>
    %cst_10 = arith.constant dense<0xFF800000> : vector<16xf32>
    %18 = vector.multi_reduction <maximumf>, %15, %cst_10 [1] : vector<16x32xf32> to vector<16xf32>
    %19 = vector.shape_cast %18 : vector<16xf32> to vector<16x1xf32>
    %20 = arith.maximumf %16, %19 : vector<16x1xf32>
    %21 = vector.broadcast %20 : vector<16x1xf32> to vector<16x32xf32>
    %22 = arith.subf %15, %21 : vector<16x32xf32>
    %23 = math.exp %22 : vector<16x32xf32>
    %cst_11 = arith.constant dense<0.000000e+00> : vector<16xf32>
    %24 = vector.multi_reduction <add>, %23, %cst_11 [1] : vector<16x32xf32> to vector<16xf32>
    %25 = vector.shape_cast %24 : vector<16xf32> to vector<16x1xf32>
    %26 = arith.subf %16, %20 : vector<16x1xf32>
    %27 = math.exp %26 : vector<16x1xf32>
    %28 = arith.mulf %27, %17 : vector<16x1xf32>
    %29 = arith.addf %28, %25 : vector<16x1xf32>
    %c0_12 = arith.constant 0 : index
    %c0_13 = arith.constant 0 : index
    %30 = vector.load %arg6[%c0_12, %c0_13] : memref<16x2xf32, #tpu.memory_space<vmem>>, vector<16x1xf32>
    tpu.vector_store %arg6[%c0_12, %c0_13], %20 {strides = array<i32>} : memref<16x2xf32, #tpu.memory_space<vmem>>, vector<16x1xf32>,
    %c0_14 = arith.constant 0 : index
    %c1_15 = arith.constant 1 : index
    %31 = vector.load %arg6[%c0_14, %c1_15] : memref<16x2xf32, #tpu.memory_space<vmem>>, vector<16x1xf32>
    tpu.vector_store %arg6[%c0_14, %c1_15], %29 {strides = array<i32>} : memref<16x2xf32, #tpu.memory_space<vmem>>, vector<16x1xf32>,
    %c0_i32_16 = arith.constant 0 : i32
    %32 = arith.cmpi eq, %arg1, %c0_i32_16 : i32
    %33 = arith.extui %32 : i1 to i32
    %c0_i32_17 = arith.constant 0 : i32
    %34 = arith.cmpi ne, %33, %c0_i32_17 : i32
    scf.if %34 {
      %c0_18 = arith.constant 0 : index
      %c0_19 = arith.constant 0 : index
      %35 = vector.load %arg2[%c0_18, %c0_19] : memref<16x64xbf16, #tpu.memory_space<vmem>>, vector<16x64xbf16>
      %36 = arith.extf %35 : vector<16x64xbf16> to vector<16x64xf32>
      %c0_20 = arith.constant 0 : index
      %c0_21 = arith.constant 0 : index
      %37 = vector.load %arg3[%c0_20, %c0_21] : memref<16x64xbf16, #tpu.memory_space<vmem>>, vector<16x64xbf16>
      %38 = arith.extf %37 : vector<16x64xbf16> to vector<16x64xf32>
      %39 = arith.mulf %36, %38 : vector<16x64xf32>
      %cst_22 = arith.constant dense<0.000000e+00> : vector<16xf32>
      %40 = vector.multi_reduction <add>, %39, %cst_22 [1] : vector<16x64xf32> to vector<16xf32>
      %41 = vector.shape_cast %40 : vector<16xf32> to vector<16x1xf32>
      %42 = math.log %29 : vector<16x1xf32>
      %43 = arith.addf %20, %42 : vector<16x1xf32>
      %44 = arith.subf %43, %41 : vector<16x1xf32>
      %c0_23 = arith.constant 0 : index
      %c0_24 = arith.constant 0 : index
      %45 = vector.load %arg5[%c0_23, %c0_24] : memref<16x1xf32, #tpu.memory_space<vmem>>, vector<16x1xf32>
      tpu.vector_store %arg5[%c0_23, %c0_24], %44 {strides = array<i32>} : memref<16x1xf32, #tpu.memory_space<vmem>>, vector<16x1xf32>,
    } else {
    }
    return
  }
  func.func @transform_0(%arg0: i32, %arg1: i32) -> (i32, i32) {
    %c0_i32 = arith.constant 0 : i32
    %c0_i32_0 = arith.constant 0 : i32
    return %arg0, %c0_i32 : i32, i32
  }
  func.func @transform_1(%arg0: i32, %arg1: i32) -> (i32, i32) {
    %c1_i32 = arith.constant 1 : i32
    %0 = arith.addi %arg0, %c1_i32 : i32
    %c2_i32 = arith.constant 2 : i32
    %c0_i32 = arith.constant 0 : i32
    %1 = arith.cmpi eq, %c2_i32, %c0_i32 : i32
    %c1_i32_0 = arith.constant 1 : i32
    %2 = arith.select %1, %c1_i32_0, %c2_i32 : i32
    %3 = arith.remsi %0, %2 : i32
    %c0_i32_1 = arith.constant 0 : i32
    %4 = arith.cmpi ne, %3, %c0_i32_1 : i32
    %c0_i32_2 = arith.constant 0 : i32
    %5 = arith.cmpi slt, %3, %c0_i32_2 : i32
    %c0_i32_3 = arith.constant 0 : i32
    %6 = arith.cmpi slt, %2, %c0_i32_3 : i32
    %7 = arith.xori %5, %6 : i1
    %8 = arith.andi %7, %4 : i1
    %9 = arith.addi %3, %2 : i32
    %10 = arith.select %8, %9, %3 : i32
    %c0_i32_4 = arith.constant 0 : i32
    %c0_i32_5 = arith.constant 0 : i32
    return %10, %c0_i32_4 : i32, i32
  }
  func.func @transform_2(%arg0: i32, %arg1: i32) -> (i32, i32) {
    %c0_i32 = arith.constant 0 : i32
    %c0_i32_0 = arith.constant 0 : i32
    return %arg1, %c0_i32 : i32, i32
  }
  func.func @transform_3(%arg0: i32, %arg1: i32) -> (i32, i32) {
    %c0_i32 = arith.constant 0 : i32
    %c0_i32_0 = arith.constant 0 : i32
    return %arg0, %c0_i32 : i32, i32
  }
}

</mosaic_0001>

<llo_original>
// kernel: tpu_custom_call.1
$region0: #{tpu_custom_call.1}
  #allocation0 [shape = 'u32[]', space=smem, size = 0x4, offset = 0x4, fixed_abs, tag = 'smem constant byte address 0x4 - core index']
  #allocation1 [shape = 'u32[144,128]{1,0:T(1,128)}', space=vmem, size = 0x12000, scoped, tag = 'internal scratch']
  #allocation2 [shape = 'f32[16,2]{1,0:T(8,128)}', space=vmem, size = 0x2000, scoped, tag = 'scratch operand']
  %s0 = inlined_call_operand.hbm [shape: bf16[32,64], index: 0, kind: input, shape index: {}]
  %s1 = inlined_call_operand.hbm [shape: bf16[32,64], index: 1, kind: input, shape index: {}]
  %s2 = inlined_call_operand.hbm [shape: bf16[32,64], index: 2, kind: input, shape index: {}]
  %s3 = inlined_call_operand.vmem [shape: f32[32,1], index: 3, kind: output, shape index: {}]
  %s4 = sld [smem:[#allocation0]]
  $region73: #{tpu_custom_call.1} parent=0
    _
  %s6 = ssub.s32 1, %s4
  %s7 = scalar_select 0, %s6, %s4
  $region1: #{tpu_custom_call.1} parent=0
    #allocation3 [shape = 'u8[8192]{0}', space=vmem, size = 0x2000, scoped, tag = 'input window, operand 0']
    #allocation4 [shape = 's32[2]{0}', space=sflag, size = 0x8, scoped, tag = 'scoped memory for tpu_custom_call.1']
    #allocation5 [shape = 'u8[8192]{0}', space=vmem, size = 0x2000, scoped, tag = 'input window, operand 1']
    #allocation6 [shape = 's32[2]{0}', space=sflag, size = 0x8, scoped, tag = 'scoped memory for tpu_custom_call.1']
    #allocation7 [shape = 'u8[8192]{0}', space=vmem, size = 0x2000, scoped, tag = 'input window, operand 2, single buffered']
    %8 = vsyncpa [#allocation4], 0
    %s9 = scalar_lea.sflag [#allocation4], 1
    %10 = vsyncpa %s9, 0
    %11 = vsyncpa [#allocation6], 0
    %s12 = scalar_lea.sflag [#allocation6], 1
    %13 = vsyncpa %s12, 0
    loop: start=0, step=1, limit=4
    $region2: #{tpu_custom_call.1} parent=1 // loop_pre_header
      _
    $region3: #{tpu_custom_call.1} parent=1 // loop_header
      %s15 = sphi 0, %s19
      %p16 = scmp.ge.s32.totalorder %s15, 4
      %s22 = sphi 0, %s34
      %s23 = sphi 0, %s30
      %s24 = sphi 0, %s22
      %s25 = sphi 0, %s23
      %s26 = sphi 0, %s24
      %s27 = sphi 0, %s25
      %s37 = sphi 0, %s39
      %s40 = sphi 0, %s37
      %s41 = sphi 0, %s40
      %s57 = sphi 0, %s41
      %s89 = sphi 0, %s91
      %s92 = sphi 0, %s89
      %s93 = sphi 0, %s92
      %s109 = sphi 0, %s93
      %s115 = sphi 0, %s117
      %s118 = sphi 0, %s115
      %s119 = sphi 0, %s118
      %s135 = sphi 0, %s119
      %s141 = sphi 0, %s143
      %s144 = sphi 0, %s141
      %s145 = sphi 0, %s144
      %s161 = sphi 0, %s145
    $region4: #{tpu_custom_call.1} parent=1 // loop_header_branch
      %18 = sbr.rel (%p16) target = $region8
    $region5: #{tpu_custom_call.1} parent=1 // loop_body
      %s20 = ssub.s32 %s15, 1
      %s21 = ssub.s32 %s15, 2
      %s28 = sadd.s32 1, %s23
      %p29 = scmp.ge.s32.totalorder %s28, 1
      %s30 = scalar_select %p29, 0, %s28
      %s31 = sadd.s32 1, %s22
      %s32 = scalar_select %p29, %s31, %s22
      %p33 = scmp.ge.s32.totalorder %s32, 2
      %s34 = scalar_select %p33, 0, %s32
      %s35 = ssub.s32 %s22, %s34
      %p36 = scmp.eq.s32.totalorder %s35, 0
      %s38 = sadd.s32 %s37, 1
      %s39 = scalar_select %p36, %s37, %s38
      %p42 = pneg %p36
      %p43 = scmp.eq.s32.totalorder %s15, 1
      %p44 = por %p42, %p43
      %p45 = scmp.ne.s32.totalorder %s37, %s40
      %p46 = scmp.eq.s32.totalorder %s15, 0
      %p47 = por %p45, %p46
      %p48 = scmp.ne.s32.totalorder %s37, %s40
      %p49 = scmp.eq.s32.totalorder %s20, 1
      %p50 = por %p48, %p49
      %p51 = scmp.ne.s32.totalorder %s40, %s41
      %p52 = scmp.eq.s32.totalorder %s20, 0
      %p53 = por %p51, %p52
      %p54 = scmp.ne.s32.totalorder %s40, %s41
      %p55 = scmp.eq.s32.totalorder %s21, 1
      %p56 = por %p54, %p55
      %p58 = scmp.ne.s32.totalorder %s41, %s57
      %p59 = scmp.eq.s32.totalorder %s21, 0
      %p60 = por %p58, %p59
      %s61 = sadd.s32 %s22, 1
      %p62 = scmp.lt.s32.totalorder %s61, 0
      %s63 = ssub.s32 0, %s61
      %s64 = scalar_select %p62, %s63, %s61
      %s65 = sand.u32 %s64, 1
      %s66 = ssub.s32 0, %s65
      %s67 = scalar_select %p62, %s66, %s65
      %p68 = scmp.ne.s32.totalorder %s67, 0
      %p69 = scmp.lt.s32.totalorder %s67, 0
      %p70 = pnand %p69, %p68
      %p71 = pneg %p70
      %s72 = sadd.s32 %s67, 2
      %s73 = scalar_select %p71, %s72, %s67
      %s74 = sadd.s32 %s34, 1
      %p75 = scmp.lt.s32.totalorder %s74, 0
      %s76 = ssub.s32 0, %s74
      %s77 = scalar_select %p75, %s76, %s74
      %s78 = sand.u32 %s77, 1
      %s79 = ssub.s32 0, %s78
      %s80 = scalar_select %p75, %s79, %s78
      %p81 = scmp.ne.s32.totalorder %s80, 0
      %p82 = scmp.lt.s32.totalorder %s80, 0
      %p83 = pnand %p82, %p81
      %p84 = pneg %p83
      %s85 = sadd.s32 %s80, 2
      %s86 = scalar_select %p84, %s85, %s80
      %s87 = ssub.s32 %s73, %s86
      %p88 = scmp.eq.s32.totalorder %s87, 0
      %s90 = sadd.s32 %s89, 1
      %s91 = scalar_select %p88, %s89, %s90
      %p94 = pneg %p88
      %p95 = scmp.eq.s32.totalorder %s15, 1
      %p96 = por %p94, %p95
      %p97 = scmp.ne.s32.totalorder %s89, %s92
      %p98 = scmp.eq.s32.totalorder %s15, 0
      %p99 = por %p97, %p98
      %p100 = scmp.ne.s32.totalorder %s89, %s92
      %p101 = scmp.eq.s32.totalorder %s20, 1
      %p102 = por %p100, %p101
      %p103 = scmp.ne.s32.totalorder %s92, %s93
      %p104 = scmp.eq.s32.totalorder %s20, 0
      %p105 = por %p103, %p104
      %p106 = scmp.ne.s32.totalorder %s92, %s93
      %p107 = scmp.eq.s32.totalorder %s21, 1
      %p108 = por %p106, %p107
      %p110 = scmp.ne.s32.totalorder %s93, %s109
      %p111 = scmp.eq.s32.totalorder %s21, 0
      %p112 = por %p110, %p111
      %s113 = ssub.s32 %s23, %s30
      %p114 = scmp.eq.s32.totalorder %s113, 0
      %s116 = sadd.s32 %s115, 1
      %s117 = scalar_select %p114, %s115, %s116
      %p120 = pneg %p114
      %p121 = scmp.eq.s32.totalorder %s15, 1
      %p122 = por %p120, %p121
      %p123 = scmp.ne.s32.totalorder %s115, %s118
      %p124 = scmp.eq.s32.totalorder %s15, 0
      %p125 = por %p123, %p124
      %p126 = scmp.ne.s32.totalorder %s115, %s118
      %p127 = scmp.eq.s32.totalorder %s20, 1
      %p128 = por %p126, %p127
      %p129 = scmp.ne.s32.totalorder %s118, %s119
      %p130 = scmp.eq.s32.totalorder %s20, 0
      %p131 = por %p129, %p130
      %p132 = scmp.ne.s32.totalorder %s118, %s119
      %p133 = scmp.eq.s32.totalorder %s21, 1
      %p134 = por %p132, %p133
      %p136 = scmp.ne.s32.totalorder %s119, %s135
      %p137 = scmp.eq.s32.totalorder %s21, 0
      %p138 = por %p136, %p137
      %s139 = ssub.s32 %s22, %s34
      %p140 = scmp.eq.s32.totalorder %s139, 0
      %s142 = sadd.s32 %s141, 1
      %s143 = scalar_select %p140, %s141, %s142
      %p146 = pneg %p140
      %p147 = scmp.eq.s32.totalorder %s15, 1
      %p148 = por %p146, %p147
      %p149 = scmp.ne.s32.totalorder %s141, %s144
      %p150 = scmp.eq.s32.totalorder %s15, 0
      %p151 = por %p149, %p150
      %p152 = scmp.ne.s32.totalorder %s141, %s144
      %p153 = scmp.eq.s32.totalorder %s20, 1
      %p154 = por %p152, %p153
      %p155 = scmp.ne.s32.totalorder %s144, %s145
      %p156 = scmp.eq.s32.totalorder %s20, 0
      %p157 = por %p155, %p156
      %p158 = scmp.ne.s32.totalorder %s144, %s145
      %p159 = scmp.eq.s32.totalorder %s21, 1
      %p160 = por %p158, %p159
      %p162 = scmp.ne.s32.totalorder %s145, %s161
      %p163 = scmp.eq.s32.totalorder %s21, 0
      %p164 = por %p162, %p163
      %p165 = scmp.le.s32.totalorder 1, %s15
      %p166 = scmp.lt.s32.totalorder %s15, 3
      %p167 = pnand %p165, %p166
      %p168 = pneg %p167
      // Predicated region
      $region9: #{tpu_custom_call.1} parent=5 // pred_check
        _
      $region10: #{tpu_custom_call.1} parent=5 // pred_check_branch
        %170 = sbr.rel (%p167) target = $region12
      $region11: #{tpu_custom_call.1} parent=5 // pred_region
        %s171 = ssub.s32 %s15, 1
        // Predicated region
        $region13: #{tpu_custom_call.1} parent=11 // pred_check
          %p172 = pneg %p131
        $region14: #{tpu_custom_call.1} parent=11 // pred_check_branch
          %174 = sbr.rel (%p172) target = $region16
        $region15: #{tpu_custom_call.1} parent=11 // pred_region
          %s175 = smul.u32 4, %s25
          %s177 = ssub.s32 256, 256
          %178 = vsyncadd [#allocation6], %s177
          %s179 = smul.addr %s175, 64
          %s180 = scalar_lea.hbm %s2, %s179
          %s181 = sshll.u32 [#allocation7], 4
          %s182 = int_to_ptr.vmem [resolvable:$true] %s181
          %187 = dma.hbm_to_vmem [thread:$0]  %s180, 256, %s182, [#allocation6], 64, 64, 4
        $region16: #{tpu_custom_call.1} parent=11 // pred_fallthru
          _
      $region12: #{tpu_custom_call.1} parent=5 // pred_fallthru
        _
      %p188 = scmp.lt.s32.totalorder %s15, 2
      // Predicated region
      $region17: #{tpu_custom_call.1} parent=5 // pred_check
        %p189 = pneg %p188
      $region18: #{tpu_custom_call.1} parent=5 // pred_check_branch
        %191 = sbr.rel (%p189) target = $region20
      $region19: #{tpu_custom_call.1} parent=5 // pred_region
        // Predicated region
        $region21: #{tpu_custom_call.1} parent=19 // pred_check
          %p192 = pneg %p47
        $region22: #{tpu_custom_call.1} parent=19 // pred_check_branch
          %194 = sbr.rel (%p192) target = $region24
        $region23: #{tpu_custom_call.1} parent=19 // pred_region
          %s195 = sand.u32 %s37, 1
          %s196 = scalar_lea.sflag [#allocation4], %s195
          %s197 = sand.u32 %s37, 1
          %s198 = smul.addr %s197, 8
          %s199 = scalar_lea.vmem [#allocation3], %s198
          %s200 = smul.u32 2, %s22
          %s202 = ssub.s32 128, 128
          %203 = vsyncadd %s196, %s202
          %s204 = smul.addr %s200, 64
          %s205 = scalar_lea.hbm %s0, %s204
          %s206 = sshll.u32 %s199, 4
          %s207 = int_to_ptr.vmem [resolvable:$true] %s206
          %212 = dma.hbm_to_vmem [thread:$0]  %s205, 128, %s207, %s196, 64, 64, 4
        $region24: #{tpu_custom_call.1} parent=19 // pred_fallthru
          _
        // Predicated region
        $region25: #{tpu_custom_call.1} parent=19 // pred_check
          %p213 = pneg %p99
        $region26: #{tpu_custom_call.1} parent=19 // pred_check_branch
          %215 = sbr.rel (%p213) target = $region28
        $region27: #{tpu_custom_call.1} parent=19 // pred_region
          %s216 = sand.u32 %s15, 1
          %s217 = scalar_lea.sflag [#allocation6], %s216
          %s218 = sand.u32 %s89, 1
          %s219 = smul.addr %s218, 8
          %s220 = scalar_lea.vmem [#allocation5], %s219
          %s221 = sadd.s32 %s22, 1
          %p222 = scmp.lt.s32.totalorder %s221, 0
          %s223 = ssub.s32 0, %s221
          %s224 = scalar_select %p222, %s223, %s221
          %s225 = sand.u32 %s224, 1
          %s226 = ssub.s32 0, %s225
          %s227 = scalar_select %p222, %s226, %s225
          %p228 = scmp.ne.s32.totalorder %s227, 0
          %p229 = scmp.lt.s32.totalorder %s227, 0
          %p230 = pnand %p229, %p228
          %p231 = pneg %p230
          %s232 = sadd.s32 %s227, 2
          %s233 = scalar_select %p231, %s232, %s227
          %s234 = smul.u32 2, %s233
          %s236 = ssub.s32 128, 128
          %237 = vsyncadd %s217, %s236
          %s238 = smul.addr %s234, 64
          %s239 = scalar_lea.hbm %s1, %s238
          %s240 = sshll.u32 %s220, 4
          %s241 = int_to_ptr.vmem [resolvable:$true] %s240
          %246 = dma.hbm_to_vmem [thread:$0]  %s239, 128, %s241, %s217, 64, 64, 4
        $region28: #{tpu_custom_call.1} parent=19 // pred_fallthru
          _
      $region20: #{tpu_custom_call.1} parent=5 // pred_fallthru
        _
      %p247 = scmp.le.s32.totalorder 1, %s15
      %p248 = scmp.lt.s32.totalorder %s15, 3
      %p249 = pnand %p247, %p248
      %p250 = pneg %p249
      // Predicated region
      $region29: #{tpu_custom_call.1} parent=5 // pred_check
        _
      $region30: #{tpu_custom_call.1} parent=5 // pred_check_branch
        %252 = sbr.rel (%p249) target = $region32
      $region31: #{tpu_custom_call.1} parent=5 // pred_region
        %s253 = ssub.s32 %s15, 1
        %s254 = sand.u32 %s40, 1
        %s255 = scalar_lea.sflag [#allocation4], %s254
        %s256 = sand.u32 %s40, 1
        %s257 = smul.addr %s256, 8
        %s258 = scalar_lea.vmem [#allocation3], %s257
        // Predicated region
        $region33: #{tpu_custom_call.1} parent=31 // pred_check
          %p259 = pneg %p53
        $region34: #{tpu_custom_call.1} parent=31 // pred_check_branch
          %261 = sbr.rel (%p259) target = $region36
        $region35: #{tpu_custom_call.1} parent=31 // pred_region
          %262 = dma.done %s255, 128
        $region36: #{tpu_custom_call.1} parent=31 // pred_fallthru
          _
        %s263 = sand.u32 %s20, 1
        %s264 = scalar_lea.sflag [#allocation6], %s263
        %s265 = sand.u32 %s92, 1
        %s266 = smul.addr %s265, 8
        %s267 = scalar_lea.vmem [#allocation5], %s266
        // Predicated region
        $region37: #{tpu_custom_call.1} parent=31 // pred_check
          %p268 = pneg %p105
        $region38: #{tpu_custom_call.1} parent=31 // pred_check_branch
          %270 = sbr.rel (%p268) target = $region40
        $region39: #{tpu_custom_call.1} parent=31 // pred_region
          %271 = dma.done %s264, 128
        $region40: #{tpu_custom_call.1} parent=31 // pred_fallthru
          _
        // Predicated region
        $region41: #{tpu_custom_call.1} parent=31 // pred_check
          %p272 = pneg %p131
        $region42: #{tpu_custom_call.1} parent=31 // pred_check_branch
          %274 = sbr.rel (%p272) target = $region44
        $region43: #{tpu_custom_call.1} parent=31 // pred_region
          %275 = dma.done [#allocation6], 256
        $region44: #{tpu_custom_call.1} parent=31 // pred_fallthru
          _
        %s276 = sand.u32 %s40, 1
        %s277 = scalar_lea.sflag [#allocation4], %s276
        %s278 = sand.u32 %s40, 1
        %s279 = smul.addr %s278, 8
        %s280 = scalar_lea.vmem [#allocation3], %s279
        %p281 = pneg %p53
        %p282 = pneg %p50
        %s283 = sand.u32 %s20, 1
        %s284 = scalar_lea.sflag [#allocation6], %s283
        %s285 = sand.u32 %s92, 1
        %s286 = smul.addr %s285, 8
        %s287 = scalar_lea.vmem [#allocation5], %s286
        %p288 = pneg %p105
        %p289 = pneg %p102
        %p290 = pneg %p131
        %p291 = pneg %p128
        %p292 = pneg %p157
        %p293 = pneg %p154
        %s294 = smul.u32 2, %s24
        %p295 = scmp.lt.s32.totalorder %s294, 3
        %s296 = scalar_select %p295, %s294, 3
        %s297 = smul.addr %s296, 8
        %s298 = scalar_lea.vmem %s3, %s297
        %s299 = smul.u32 2, %s24
        %s300 = sadd.s32 %s24, 1
        %p301 = scmp.lt.s32.totalorder %s300, 0
        %s302 = ssub.s32 0, %s300
        %s303 = scalar_select %p301, %s302, %s300
        %s304 = sand.u32 %s303, 1
        %s305 = ssub.s32 0, %s304
        %s306 = scalar_select %p301, %s305, %s304
        %p307 = scmp.ne.s32.totalorder %s306, 0
        %p308 = scmp.lt.s32.totalorder %s306, 0
        %p309 = pnand %p308, %p307
        %p310 = pneg %p309
        %s311 = sadd.s32 %s306, 2
        %s312 = scalar_select %p310, %s311, %s306
        %s313 = smul.u32 2, %s312
        %s314 = smul.u32 4, %s25
        %s315 = smul.u32 2, %s24
        %p316 = scmp.lt.s32.totalorder %s315, 3
        %s317 = scalar_select %p316, %s315, 3
        %s318 = smul.addr %s317, 8
        %s319 = scalar_lea.vmem %s3, %s318
        %s320 = smul.u32 2, %s24
        %p322 = scmp.eq.s32.totalorder %s25, 0
        // Predicated region
        $region45: #{tpu_custom_call.1} parent=31 // pred_check
          %p323 = pneg %p322
        $region46: #{tpu_custom_call.1} parent=31 // pred_check_branch
          %325 = sbr.rel (%p323) target = $region48
        $region47: #{tpu_custom_call.1} parent=31 // pred_region
          %vm326 = vcmask 7168
          %327 = vst.msk [vmem:[#allocation2] sm:$0xff] %vm326, -inf
          %328 = vst.msk [vmem:[#allocation2 + $0x8] sm:$0xff] %vm326, -inf
          %vm329 = vcmask 15368
          %330 = vst.msk [vmem:[#allocation2] sm:$0xff] %vm329, 0.0
          %331 = vst.msk [vmem:[#allocation2 + $0x8] sm:$0xff] %vm329, 0.0
        $region48: #{tpu_custom_call.1} parent=31 // pred_fallthru
          _
        %v332 = vld [vmem:[%s258] sm:$0xf]
        %v333 = vld [vmem:[%s258 + $0x4] sm:$0xf]
        %v334 = vld [vmem:[#allocation7] sm:$0xf]
        %v335 = vld [vmem:[#allocation7 + $0x4] sm:$0xf]
        %v336 = vld [vmem:[#allocation7 + $0x8] sm:$0xf]
        %v337 = vld [vmem:[#allocation7 + $0xc] sm:$0xf]
        %v340 = vunpack.c.l.b16 %v332
        %v341 = vunpack.c.l.b16 %v333
        %v342 = vpack.c.b16 %v341, %v340
        %v347 = vunpack.c.l.b16 %v334
        %v348 = vunpack.c.l.b16 %v335
        %v349 = vunpack.c.l.b16 %v336
        %v350 = vunpack.c.l.b16 %v337
        %v351 = vpack.c.b16 %v348, %v347
        %v352 = vpack.c.b16 %v350, %v349
        %vm353 = vcmask 523264
        %v355 = vsel %vm353, %v342, 0
        %v358 = vsel %vm353, %v351, 0
        %v361 = vsel %vm353, %v352, 0
        %363 = vmatprep.subr.bf16.mxu0 0
        %364 = vmatpush1.bf16.xpose.msra.mxu0 0
        %365 = vmatprep.subr.bf16.mxu0 0
        %366 = vmatpush1.bf16.xpose.msra.mxu0 0
        %367 = vmatprep.subr.bf16.mxu0 0
        %368 = vmatpush1.bf16.xpose.msra.mxu0 0
        %369 = vmatprep.subr.bf16.mxu0 0
        %370 = vmatpush1.bf16.xpose.msra.mxu0 0
        %371 = vmatprep.subr.bf16.mxu0 0
        %372 = vmatpush1.bf16.xpose.msra.mxu0 0
        %373 = vmatprep.subr.bf16.mxu0 0
        %374 = vmatpush1.bf16.xpose.msra.mxu0 0
        %375 = vmatprep.subr.bf16.mxu0 0
        %376 = vmatpush1.bf16.xpose.msra.mxu0 %v361
        %377 = vmatprep.subr.bf16.mxu0 0
        %378 = vmatpush1.bf16.xpose.msra.mxu0 %v358
        %379 = vmatprep.subr.bf16.mxu0 0
        %380 = vmatpush2.bf16.xpose.msra.mxu0 0
        %381 = vmatprep.subr.bf16.mxu0 0
        %382 = vmatpush2.bf16.xpose.msra.mxu0 0
        %383 = vmatprep.subr.bf16.mxu0 0
        %384 = vmatpush2.bf16.xpose.msra.mxu0 0
        %385 = vmatprep.subr.bf16.mxu0 0
        %386 = vmatpush2.bf16.xpose.msra.mxu0 0
        %387 = vmatprep.subr.bf16.mxu0 0
        %388 = vmatpush2.bf16.xpose.msra.mxu0 0
        %389 = vmatprep.subr.bf16.mxu0 0
        %390 = vmatpush2.bf16.xpose.msra.mxu0 0
        %391 = vmatprep.subr.bf16.mxu0 0
        %392 = vmatpush2.bf16.xpose.msra.mxu0 0
        %393 = vmatprep.subr.bf16.mxu0 0
        %394 = vmatpush2.bf16.xpose.msra.mxu0 0
        %395 = vmatprep.mubr.bf16.mxu0 0
        %396 = vmatmul.mubr.bf16.gmra.mxu0 %v355
        %v397 = vpop.f32.mrf.mxu0
        %v398 = vadd.f32 0.0, %v397
        %v399 = vpop.f32.mrf.mxu0
        %v400 = vpop.f32.mrf.mxu0
        %v401 = vadd.f32 0.0, %v400
        %v402 = vpop.f32.mrf.mxu0
        %403 = vdwg.mxu0
        %s404 = smul.u32 %s24, 16
        %s405 = smul.u32 %s25, 32
        %s406 = sadd.s32 %s405, 32
        %p407 = scmp.lt.s32.totalorder %s404, %s406
        %s408 = sadd.s32 %s404, 16
        %p409 = scmp.lt.s32.totalorder %s405, %s408
        %p410 = pnand %p407, %p409
        %p411 = pneg %p410
        // Predicated region
        $region49: #{tpu_custom_call.1} parent=31 // pred_check
          _
        $region50: #{tpu_custom_call.1} parent=31 // pred_check_branch
          %413 = sbr.rel (%p410) target = $region52
        $region51: #{tpu_custom_call.1} parent=31 // pred_region
          %v414 = vlaneseq
          %v415 = vshrl.u32 %v414, 7
          %v416 = vadd.s32 %v415, 8
          %v417 = vstv %s404
          %v418 = vadd.s32 %v415, %v417
          %v419 = vadd.s32 %v416, %v417
          %v420 = vlaneseq
          %v421 = vand.u32 %v420, 127
          %v422 = vstv %s405
          %v423 = vadd.s32 %v421, %v422
          %vm424 = vcmp.eq.s32.totalorder %v418, %v423
          %vm425 = vcmp.eq.s32.totalorder %v419, %v423
          %v426 = vsel %vm424, -1e+30, %v398
          %v427 = vsel %vm425, -1e+30, %v401
        $region52: #{tpu_custom_call.1} parent=31 // pred_fallthru
          %v428 = vphi 0, %v426
          %v429 = vphi 0, %v427
        // Predicated region
        $region53: #{tpu_custom_call.1} parent=31 // pred_check
          %p430 = pneg %p410
        $region54: #{tpu_custom_call.1} parent=31 // pred_check_branch
          %432 = sbr.rel (%p430) target = $region56
        $region55: #{tpu_custom_call.1} parent=31 // pred_region
          _
        $region56: #{tpu_custom_call.1} parent=31 // pred_fallthru
          %v433 = vphi %v428, %v398
          %v434 = vphi %v429, %v401
        %v435 = vld [vmem:[#allocation2] sm:$0xff]
        %v436 = vld [vmem:[#allocation2 + $0x8] sm:$0xff]
        %vm437 = vcmask 261120
        %v438 = vsel %vm437, %v433, -inf
        %439 = vmax.xlane.f32.xlu0 %v438
        %v440 = vpop.xlane.xlu0 %439
        %v441 = vsel %vm437, %v434, -inf
        %442 = vmax.xlane.f32.xlu0 %v441
        %v443 = vpop.xlane.xlu0 %442
        %v444 = vmax.f32 %v435, %v440
        %v445 = vmax.f32 %v436, %v443
        %447 = vset.pattern.permute.xlu0 0
        %448 = vperm.xlu0 %447, %v444
        %v449 = vpop.permute.xlu0 %448
        %452 = vset.pattern.permute.xlu0 0
        %453 = vperm.xlu0 %452, %v445
        %v454 = vpop.permute.xlu0 %453
        %v456 = vsub.f32 %v433, %v449
        %v457 = vsub.f32 %v434, %v454
        %v458 = vmul.f32 %v456, 1.442695
        %v459 = vpow.pop %v458
        %v460 = vmul.f32 %v457, 1.442695
        %v461 = vpow.pop %v460
        %v462 = vsel %vm437, %v459, 0.0
        %463 = vadd.xlane.f32.xlu0 %v462
        %v464 = vpop.xlane.xlu0 %463
        %v465 = vsel %vm437, %v461, 0.0
        %466 = vadd.xlane.f32.xlu0 %v465
        %v467 = vpop.xlane.xlu0 %466
        %v468 = vsub.f32 %v435, %v444
        %v469 = vsub.f32 %v436, %v445
        %v470 = vmul.f32 %v468, 1.442695
        %v471 = vpow.pop %v470
        %v472 = vmul.f32 %v469, 1.442695
        %v473 = vpow.pop %v472
        %476 = vrot.lane.b32.xlu0 %v435, 127
        %v477 = vpop.permute.xlu0 %476
        %478 = vrot.lane.b32.xlu0 %v436, 127
        %v479 = vpop.permute.xlu0 %478
        %v482 = vmul.f32 %v471, %v477
        %v483 = vmul.f32 %v473, %v479
        %v484 = vadd.f32 %v482, %v464
        %v485 = vadd.f32 %v483, %v467
        %vm486 = vcmask 7168
        %487 = vst.msk [vmem:[#allocation2] sm:$0xff] %vm486, %v444
        %488 = vst.msk [vmem:[#allocation2 + $0x8] sm:$0xff] %vm486, %v445
        %491 = vrot.lane.b32.xlu0 %v484, 1
        %v492 = vpop.permute.xlu0 %491
        %493 = vrot.lane.b32.xlu0 %v485, 1
        %v494 = vpop.permute.xlu0 %493
        %vm497 = vcmask 15368
        %498 = vst.msk [vmem:[#allocation2] sm:$0xff] %vm497, %v492
        %499 = vst.msk [vmem:[#allocation2 + $0x8] sm:$0xff] %vm497, %v494
        // Predicated region
        $region57: #{tpu_custom_call.1} parent=31 // pred_check
          %p500 = pneg %p322
        $region58: #{tpu_custom_call.1} parent=31 // pred_check_branch
          %502 = sbr.rel (%p500) target = $region60
        $region59: #{tpu_custom_call.1} parent=31 // pred_region
          %v503 = vld [vmem:[%s258] sm:$0xf]
          %v504 = vld [vmem:[%s258 + $0x4] sm:$0xf]
          %v505 = vunpack.c.l.bf16 %v503
          %v506 = vunpack.c.l.bf16 %v504
          %v507 = vld [vmem:[%s267] sm:$0xf]
          %v508 = vld [vmem:[%s267 + $0x4] sm:$0xf]
          %v509 = vunpack.c.l.bf16 %v507
          %v510 = vunpack.c.l.bf16 %v508
          %v511 = vmul.f32 %v505, %v509
          %v512 = vmul.f32 %v506, %v510
          %v513 = vsel %vm353, %v511, 0.0
          %514 = vadd.xlane.f32.xlu0 %v513
          %v515 = vpop.xlane.xlu0 %514
          %v516 = vsel %vm353, %v512, 0.0
          %517 = vadd.xlane.f32.xlu0 %v516
          %v518 = vpop.xlane.xlu0 %517
          %v519 = vlog2.pop %v484
          %v520 = vmul.f32 %v519, 0.6931472
          %v521 = vlog2.pop %v485
          %v522 = vmul.f32 %v521, 0.6931472
          %v523 = vadd.f32 %v444, %v520
          %v524 = vadd.f32 %v445, %v522
          %v525 = vsub.f32 %v523, %v515
          %v526 = vsub.f32 %v524, %v518
          %527 = vst.msk [vmem:[%s319] sm:$0xff] %vm486, %v525
          %528 = vst.msk [vmem:[%s319 + $0x8] sm:$0xff] %vm486, %v526
        $region60: #{tpu_custom_call.1} parent=31 // pred_fallthru
          _
        %s529 = smul.u32 2, %s24
        %p530 = scmp.lt.s32.totalorder %s529, 3
        %s531 = scalar_select %p530, %s529, 3
        %s532 = smul.addr %s531, 8
        %s533 = scalar_lea.vmem %s3, %s532
        // Predicated region
        $region61: #{tpu_custom_call.1} parent=31 // pred_check
          %p534 = pneg %p154
        $region62: #{tpu_custom_call.1} parent=31 // pred_check_branch
          %536 = sbr.rel (%p534) target = $region64
        $region63: #{tpu_custom_call.1} parent=31 // pred_region
          %s537 = smul.u32 2, %s24
        $region64: #{tpu_custom_call.1} parent=31 // pred_fallthru
          _
      $region32: #{tpu_custom_call.1} parent=5 // pred_fallthru
        _
      %p538 = scmp.le.s32.totalorder 2, %s15
      // Predicated region
      $region65: #{tpu_custom_call.1} parent=5 // pred_check
        %p539 = pneg %p538
      $region66: #{tpu_custom_call.1} parent=5 // pred_check_branch
        %541 = sbr.rel (%p539) target = $region68
      $region67: #{tpu_custom_call.1} parent=5 // pred_region
        %s542 = ssub.s32 %s15, 2
        // Predicated region
        $region69: #{tpu_custom_call.1} parent=67 // pred_check
          %p543 = pneg %p160
        $region70: #{tpu_custom_call.1} parent=67 // pred_check_branch
          %545 = sbr.rel (%p543) target = $region72
        $region71: #{tpu_custom_call.1} parent=67 // pred_region
          %s546 = smul.u32 2, %s26
          %p547 = scmp.lt.s32.totalorder %s546, 3
          %s548 = scalar_select %p547, %s546, 3
          %s549 = smul.addr %s548, 8
          %s550 = scalar_lea.vmem %s3, %s549
        $region72: #{tpu_custom_call.1} parent=67 // pred_fallthru
          _
      $region68: #{tpu_custom_call.1} parent=5 // pred_fallthru
        _
    $region6: #{tpu_custom_call.1} parent=1 // loop_footer
      %s19 = sadd.s32 1, %s15
    $region7: #{tpu_custom_call.1} parent=1 // loop_footer_branch
      %14 = sbr.rel target = $region3
    $region8: #{tpu_custom_call.1} parent=1 // loop_exit
      _
    %551 = vsyncpa [#allocation4], 1
    %s552 = scalar_lea.sflag [#allocation4], 1
    %553 = vsyncpa %s552, 1
    %554 = vsyncpa [#allocation6], 1
    %s555 = scalar_lea.sflag [#allocation6], 1
    %556 = vsyncpa %s555, 1

</llo_original>
